<compile_context>
chip_gen: v5e
topology: v5e:2x2
jax: 0.10.0
libtpu: 0.0.40
codegen_flags: <defaults>
</compile_context>

<pallas_src>
import functools

import jax
import jax.numpy as jnp
from jax.experimental import pallas as pl
from jax.experimental.pallas import tpu as pltpu


# -----------------------------------------------------------------------------
# Config (mirrors config['model']['TN'] in the original module)
# -----------------------------------------------------------------------------
OUT_CH = [32, 64]          # layer_out_channels
USE_BIAS = True
Z_SIZE = 128               # unused in forward (kept for fidelity with __init__)
_LANE = 128


def _get_layer_data(weights, start_index, end_index, shape, use_bias):
    """Faithful re-implementation of ColorsAndPointsTargetNetwork._get_layer_data."""
    layer = {"weight": weights[start_index:end_index].reshape(shape[0], shape[1])}
    if use_bias:
        layer["bias"] = weights[end_index:end_index + shape[0]]
        end_index = end_index + shape[0]
    return layer, end_index


def build_params(weights, out_ch=OUT_CH, use_bias=USE_BIAS):
    """Slice the flat weight vector exactly like the PyTorch __init__ does."""
    layers = []
    layer, split = _get_layer_data(weights, 0, out_ch[0] * 3, (out_ch[0], 3), use_bias)
    layers.append(layer)
    for x in range(1, len(out_ch)):
        layer, split = _get_layer_data(
            weights, split, split + out_ch[x - 1] * out_ch[x],
            (out_ch[x], out_ch[x - 1]), use_bias)
        layers.append(layer)
    output, split = _get_layer_data(weights, split, split + out_ch[-1] * 3,
                                    (3, out_ch[-1]), use_bias)
    assert split == weights.shape[0], (split, weights.shape[0])
    return layers, output


def total_weight_len(out_ch=OUT_CH, use_bias=USE_BIAS):
    n = out_ch[0] * 3 + (out_ch[0] if use_bias else 0)
    for x in range(1, len(out_ch)):
        n += out_ch[x - 1] * out_ch[x] + (out_ch[x] if use_bias else 0)
    n += out_ch[-1] * 3 + (3 if use_bias else 0)
    return n


def _round_up(a, b):
    return ((a + b - 1) // b) * b


def _default_tanh_dtype():
    """bf16 tanh on chips with a bf16 EUP path (v6e / v7x); f32 elsewhere (v5e, v4, CPU)."""
    try:
        kind = jax.devices()[0].device_kind.lower()
    except Exception:
        return jnp.float32
    if ("v6" in kind) or ("v7" in kind) or ("trillium" in kind):
        return jnp.bfloat16
    return jnp.float32


# -----------------------------------------------------------------------------
# Pallas kernel (points-on-lanes layout, sigmoid constants pre-folded into weights)
#   x_ref : (3,  tile_n)      w1_ref: (C1, 3)   b1_ref: (C1, 1)
#   w2_ref: (C2, C1)          b2_ref: (C2, 1)
#   wo_ref: (3,  C2)          bo_ref: (3,  1)
#   out_ref: (3, tile_n)
# -----------------------------------------------------------------------------
def tn_kernel(x_ref, w1_ref, b1_ref, w2_ref, b2_ref, wo_ref, bo_ref, out_ref, *,
              tanh_dtype):
    x = x_ref[...]                                   # (3, tile_n) f32
    w1 = w1_ref[...]                                 # (C1, 3), pre-scaled (0.5 fold)

    # Layer 1 (K=3): outer-product FMAs on the VPU (a K=3 MXU pass is <3% utilized).
    # TODO(synk): if a bundle dump shows VALU saturating after the bf16-tanh change,
    #             switch this to jnp.dot on the (otherwise mostly idle) MXU.
    p1 = (w1[:, 0:1] * x[0:1, :]
          + w1[:, 1:2] * x[1:2, :]
          + w1[:, 2:3] * x[2:3, :]
          + b1_ref[...])                             # == 0.5 * (W1 @ x + b1)
    t1 = jnp.tanh(p1.astype(tanh_dtype)).astype(jnp.float32)   # single EUP transcendental

    # Layer 2: MXU matmul, f32 accumulation.  w2/b2 carry the folded sigmoid constants.
    p2 = jnp.dot(w2_ref[...], t1, preferred_element_type=jnp.float32) + b2_ref[...]
    t2 = jnp.tanh(p2.astype(tanh_dtype)).astype(jnp.float32)   # (C2, tile_n)

    # Output layer (no activation).  wo/bo carry the folded sigmoid constants.
    out_ref[...] = (jnp.dot(wo_ref[...], t2, preferred_element_type=jnp.float32)
                    + bo_ref[...])                   # (3, tile_n)


def colors_and_points_target_network(x, weights, *, tile_n=8192, tanh_dtype=None):
    """JAX/Pallas forward equivalent to ColorsAndPointsTargetNetwork.forward."""
    assert USE_BIAS, "kernel path assumes use_bias=True (matches provided config)"
    layers, output = build_params(weights)
    assert len(layers) == 2, "kernel is written for two hidden layers (OUT_CH of length 2)"

    N, in_dim = x.shape
    assert in_dim == 3
    c1 = layers[0]["weight"].shape[0]
    c2 = layers[1]["weight"].shape[0]

    if tanh_dtype is None:
        tanh_dtype = _default_tanh_dtype()

    # ---- tile selection -------------------------------------------------------------
    n_aligned = _round_up(N, _LANE)
    tile_n = min(tile_n, n_aligned)                       # don't over-size for tiny clouds
    tile_n = max(_LANE, (tile_n // _LANE) * _LANE)        # multiple of the lane width
    if n_aligned >= 2 * _LANE:
        # Keep >= 2 grid steps whenever the cloud spans >= 2 lane tiles so v7x's two
        # TensorCores both get work (grid axis is "parallel"); no-op for large clouds.
        tile_n = min(tile_n, _round_up(n_aligned // 2, _LANE))
    num_tiles = pl.cdiv(N, tile_n)

    # ---- fold sigmoid(h) = 0.5*(tanh(0.5*h)+1) into the tiny weight matrices ---------
    # t1 = tanh(w1f @ x + b1f)   with  w1f = 0.5*W1,  b1f = 0.5*b1
    # t2 = tanh(w2f @ t1 + b2f)  with  w2f = 0.25*W2, b2f = 0.5*b2 + 0.25*W2.sum(1)
    # y  = wof @ t2 + bof        with  wof = 0.5*Wo,  bof = bo + 0.5*Wo.sum(1)
    w1 = layers[0]["weight"].astype(jnp.float32)               # (C1, 3)
    b1 = layers[0]["bias"].astype(jnp.float32)                 # (C1,)
    w2 = layers[1]["weight"].astype(jnp.float32)               # (C2, C1)
    b2 = layers[1]["bias"].astype(jnp.float32)                 # (C2,)
    wo = output["weight"].astype(jnp.float32)                  # (3,  C2)
    bo = output["bias"].astype(jnp.float32)                    # (3,)

    w1f = 0.5 * w1
    b1f = (0.5 * b1).reshape(c1, 1)
    w2f = 0.25 * w2
    b2f = (0.5 * b2 + 0.25 * jnp.sum(w2, axis=1)).reshape(c2, 1)
    wof = 0.5 * wo
    bof = (bo + 0.5 * jnp.sum(wo, axis=1)).reshape(3, 1)

    # Points-on-lanes layout: (N, 3) -> (3, N).  No padding: Pallas handles the ragged
    # edge block (input garbage lanes are harmless, edge output stores are masked).
    x_t = jnp.transpose(x)                           # (3, N)

    def resident(shape):
        # tiny weight/bias operands: full-extent block, constant index map -> VMEM-resident
        return pl.BlockSpec(shape, lambda i: (0,) * len(shape))

    cost = pl.CostEstimate(
        flops=2 * N * (3 * c1 + c1 * c2 + c2 * 3),
        transcendentals=N * (c1 + c2),
        bytes_accessed=4 * (3 * N * 2 + int(total_weight_len())),
    )

    y_t = pl.pallas_call(
        functools.partial(tn_kernel, tanh_dtype=tanh_dtype),
        out_shape=jax.ShapeDtypeStruct((3, N), jnp.float32),
        grid_spec=pl.GridSpec(
            grid=(num_tiles,),
            in_specs=[
                pl.BlockSpec((3, tile_n), lambda i: (0, i)),   # x tile (lane-dense)
                resident(w1f.shape), resident(b1f.shape),
                resident(w2f.shape), resident(b2f.shape),
                resident(wof.shape), resident(bof.shape),
            ],
            out_specs=pl.BlockSpec((3, tile_n), lambda i: (0, i)),
        ),
        compiler_params=pltpu.CompilerParams(
            dimension_semantics=("parallel",)),
        cost_estimate=cost,
    )(x_t, w1f, b1f, w2f, b2f, wof, bof)

    # TODO(synk): the flanking (N,3)<->(3,N) transposes roughly double end-to-end HBM
    #             traffic for very large clouds; drop them if callers can use (3, N).
    return jnp.transpose(y_t)                        # back to (N, 3)


def reference_forward(x, weights):
    """Pure-JAX reference mirroring the PyTorch forward (exp-form sigmoid, f32)."""
    layers, output = build_params(weights)
    h = x
    for layer in layers:
        h = h @ layer["weight"].T
        if USE_BIAS:
            h = h + layer["bias"]
        h = jax.nn.sigmoid(h)
    return h @ output["weight"].T + (output["bias"] if USE_BIAS else 0.0)


if __name__ == "__main__":
    key = jax.random.PRNGKey(0)
    k_x, k_w = jax.random.split(key)

    N = 1000  # deliberately not a multiple of the lane width or the tile
    x = jax.random.normal(k_x, (N, 3), dtype=jnp.float32)

    n_w = total_weight_len()
    weights = 0.1 * jax.random.normal(k_w, (n_w,), dtype=jnp.float32)

    fwd = jax.jit(colors_and_points_target_network)
    out = jax.block_until_ready(fwd(x, weights))

    ref = reference_forward(x, weights)
    assert out.shape == (N, 3)
    # f32 path: tanh-form vs exp-form sigmoid differs only at float-rounding level.
    # bf16-tanh path (v6e/v7x): loosen tolerance accordingly.
    tol = 1e-4 if _default_tanh_dtype() == jnp.float32 else 2e-2
    err = float(jnp.max(jnp.abs(out - ref)))
    assert jnp.allclose(out, ref, atol=tol, rtol=tol), err

    print("KERNEL_OK")
</pallas_src>

<mosaic_0001>
module attributes {stable_mosaic.version = 11 : i64} {
  func.func @tn_kernel(%arg0: i32, %arg1: memref<3x512xf32, #tpu.memory_space<vmem>>, %arg2: memref<32x3xf32, #tpu.memory_space<vmem>>, %arg3: memref<32x1xf32, #tpu.memory_space<vmem>>, %arg4: memref<64x32xf32, #tpu.memory_space<vmem>>, %arg5: memref<64x1xf32, #tpu.memory_space<vmem>>, %arg6: memref<3x64xf32, #tpu.memory_space<vmem>>, %arg7: memref<3x1xf32, #tpu.memory_space<vmem>>, %arg8: memref<3x512xf32, #tpu.memory_space<vmem>>) attributes {dimension_semantics = [#tpu.dimension_semantics<parallel>], iteration_bounds = array<i64: 2>, scalar_prefetch = 0 : i64, scratch_operands = 0 : i64, tpu.core_type = #tpu.core_type<tc>, window_params = [{transform_indices = @transform_0, window_bounds = array<i64: 3, 512>}, {pipeline_mode = #tpu.pipeline_mode<synchronous>, transform_indices = @transform_1, window_bounds = array<i64: 32, 3>}, {pipeline_mode = #tpu.pipeline_mode<synchronous>, transform_indices = @transform_2, window_bounds = array<i64: 32, 1>}, {pipeline_mode = #tpu.pipeline_mode<synchronous>, transform_indices = @transform_3, window_bounds = array<i64: 64, 32>}, {pipeline_mode = #tpu.pipeline_mode<synchronous>, transform_indices = @transform_4, window_bounds = array<i64: 64, 1>}, {pipeline_mode = #tpu.pipeline_mode<synchronous>, transform_indices = @transform_5, window_bounds = array<i64: 3, 64>}, {pipeline_mode = #tpu.pipeline_mode<synchronous>, transform_indices = @transform_6, window_bounds = array<i64: 3, 1>}, {transform_indices = @transform_7, window_bounds = array<i64: 3, 512>}]} {
    %c0 = arith.constant 0 : index
    %c0_0 = arith.constant 0 : index
    %0 = vector.load %arg1[%c0, %c0_0] : memref<3x512xf32, #tpu.memory_space<vmem>>, vector<3x512xf32>
    %c0_1 = arith.constant 0 : index
    %c0_2 = arith.constant 0 : index
    %1 = vector.load %arg2[%c0_1, %c0_2] : memref<32x3xf32, #tpu.memory_space<vmem>>, vector<32x3xf32>
    %2 = vector.extract_strided_slice %1 {offsets = [0, 0], sizes = [32, 1], strides = [1, 1]} : vector<32x3xf32> to vector<32x1xf32>
    %3 = vector.extract_strided_slice %0 {offsets = [0, 0], sizes = [1, 512], strides = [1, 1]} : vector<3x512xf32> to vector<1x512xf32>
    %4 = vector.broadcast %2 : vector<32x1xf32> to vector<32x512xf32>
    %5 = vector.broadcast %3 : vector<1x512xf32> to vector<32x512xf32>
    %6 = arith.mulf %4, %5 : vector<32x512xf32>
    %7 = vector.extract_strided_slice %1 {offsets = [0, 1], sizes = [32, 1], strides = [1, 1]} : vector<32x3xf32> to vector<32x1xf32>
    %8 = vector.extract_strided_slice %0 {offsets = [1, 0], sizes = [1, 512], strides = [1, 1]} : vector<3x512xf32> to vector<1x512xf32>
    %9 = vector.broadcast %7 : vector<32x1xf32> to vector<32x512xf32>
    %10 = vector.broadcast %8 : vector<1x512xf32> to vector<32x512xf32>
    %11 = arith.mulf %9, %10 : vector<32x512xf32>
    %12 = arith.addf %6, %11 : vector<32x512xf32>
    %13 = vector.extract_strided_slice %1 {offsets = [0, 2], sizes = [32, 1], strides = [1, 1]} : vector<32x3xf32> to vector<32x1xf32>
    %14 = vector.extract_strided_slice %0 {offsets = [2, 0], sizes = [1, 512], strides = [1, 1]} : vector<3x512xf32> to vector<1x512xf32>
    %15 = vector.broadcast %13 : vector<32x1xf32> to vector<32x512xf32>
    %16 = vector.broadcast %14 : vector<1x512xf32> to vector<32x512xf32>
    %17 = arith.mulf %15, %16 : vector<32x512xf32>
    %18 = arith.addf %12, %17 : vector<32x512xf32>
    %c0_3 = arith.constant 0 : index
    %c0_4 = arith.constant 0 : index
    %19 = vector.load %arg3[%c0_3, %c0_4] : memref<32x1xf32, #tpu.memory_space<vmem>>, vector<32x1xf32>
    %20 = vector.broadcast %19 : vector<32x1xf32> to vector<32x512xf32>
    %21 = arith.addf %18, %20 : vector<32x512xf32>
    %22 = math.tanh %21 : vector<32x512xf32>
    %c0_5 = arith.constant 0 : index
    %c0_6 = arith.constant 0 : index
    %23 = vector.load %arg4[%c0_5, %c0_6] : memref<64x32xf32, #tpu.memory_space<vmem>>, vector<64x32xf32>
    %cst = arith.constant dense<0.000000e+00> : vector<64x512xf32>
    %24 = tpu.matmul %23, %22, %cst {dimension_numbers = #tpu.dot_dimension_numbers<[1], [0], [0], [1], [0, 0, 1, 1], [], []>} : vector<64x32xf32>, vector<32x512xf32>, vector<64x512xf32> -> vector<64x512xf32>
    %c0_7 = arith.constant 0 : index
    %c0_8 = arith.constant 0 : index
    %25 = vector.load %arg5[%c0_7, %c0_8] : memref<64x1xf32, #tpu.memory_space<vmem>>, vector<64x1xf32>
    %26 = vector.broadcast %25 : vector<64x1xf32> to vector<64x512xf32>
    %27 = arith.addf %24, %26 : vector<64x512xf32>
    %28 = math.tanh %27 : vector<64x512xf32>
    %c0_9 = arith.constant 0 : index
    %c0_10 = arith.constant 0 : index
    %29 = vector.load %arg6[%c0_9, %c0_10] : memref<3x64xf32, #tpu.memory_space<vmem>>, vector<3x64xf32>
    %cst_11 = arith.constant dense<0.000000e+00> : vector<3x512xf32>
    %30 = tpu.matmul %29, %28, %cst_11 {dimension_numbers = #tpu.dot_dimension_numbers<[1], [0], [0], [1], [0, 0, 1, 1], [], []>} : vector<3x64xf32>, vector<64x512xf32>, vector<3x512xf32> -> vector<3x512xf32>
    %c0_12 = arith.constant 0 : index
    %c0_13 = arith.constant 0 : index
    %31 = vector.load %arg7[%c0_12, %c0_13] : memref<3x1xf32, #tpu.memory_space<vmem>>, vector<3x1xf32>
    %32 = vector.broadcast %31 : vector<3x1xf32> to vector<3x512xf32>
    %33 = arith.addf %30, %32 : vector<3x512xf32>
    %c0_14 = arith.constant 0 : index
    %c0_15 = arith.constant 0 : index
    %34 = vector.load %arg8[%c0_14, %c0_15] : memref<3x512xf32, #tpu.memory_space<vmem>>, vector<3x512xf32>
    tpu.vector_store %arg8[%c0_14, %c0_15], %33 {strides = array<i32>} : memref<3x512xf32, #tpu.memory_space<vmem>>, vector<3x512xf32>,
    return
  }
  func.func @transform_0(%arg0: i32) -> (i32, i32) {
    %c0_i32 = arith.constant 0 : i32
    %c0_i32_0 = arith.constant 0 : i32
    return %c0_i32, %arg0 : i32, i32
  }
  func.func @transform_1(%arg0: i32) -> (i32, i32) {
    %c0_i32 = arith.constant 0 : i32
    %c0_i32_0 = arith.constant 0 : i32
    %c0_i32_1 = arith.constant 0 : i32
    return %c0_i32, %c0_i32_0 : i32, i32
  }
  func.func @transform_2(%arg0: i32) -> (i32, i32) {
    %c0_i32 = arith.constant 0 : i32
    %c0_i32_0 = arith.constant 0 : i32
    %c0_i32_1 = arith.constant 0 : i32
    return %c0_i32, %c0_i32_0 : i32, i32
  }
  func.func @transform_3(%arg0: i32) -> (i32, i32) {
    %c0_i32 = arith.constant 0 : i32
    %c0_i32_0 = arith.constant 0 : i32
    %c0_i32_1 = arith.constant 0 : i32
    return %c0_i32, %c0_i32_0 : i32, i32
  }
  func.func @transform_4(%arg0: i32) -> (i32, i32) {
    %c0_i32 = arith.constant 0 : i32
    %c0_i32_0 = arith.constant 0 : i32
    %c0_i32_1 = arith.constant 0 : i32
    return %c0_i32, %c0_i32_0 : i32, i32
  }
  func.func @transform_5(%arg0: i32) -> (i32, i32) {
    %c0_i32 = arith.constant 0 : i32
    %c0_i32_0 = arith.constant 0 : i32
    %c0_i32_1 = arith.constant 0 : i32
    return %c0_i32, %c0_i32_0 : i32, i32
  }
  func.func @transform_6(%arg0: i32) -> (i32, i32) {
    %c0_i32 = arith.constant 0 : i32
    %c0_i32_0 = arith.constant 0 : i32
    %c0_i32_1 = arith.constant 0 : i32
    return %c0_i32, %c0_i32_0 : i32, i32
  }
  func.func @transform_7(%arg0: i32) -> (i32, i32) {
    %c0_i32 = arith.constant 0 : i32
    %c0_i32_0 = arith.constant 0 : i32
    return %c0_i32, %arg0 : i32, i32
  }
}

</mosaic_0001>

<llo_original>
// kernel: colors_and_points_target_network.1
$region0: #{colors_and_points_target_network.1}
  #allocation0 [shape = 'u32[]', space=smem, size = 0x4, offset = 0x4, fixed_abs, tag = 'smem constant byte address 0x4 - core index']
  #allocation1 [shape = 'u32[72,128]{1,0:T(1,128)}', space=vmem, size = 0x9000, scoped, tag = 'internal scratch']
  %s0 = inlined_call_operand.vmem [shape: f32[3,1000], index: 0, kind: input, shape index: {}]
  %s1 = inlined_call_operand.vmem [shape: f32[32,3], index: 1, kind: input, shape index: {}]
  %s2 = inlined_call_operand.vmem [shape: f32[32,1], index: 2, kind: input, shape index: {}]
  %s3 = inlined_call_operand.vmem [shape: f32[64,32], index: 3, kind: input, shape index: {}]
  %s4 = inlined_call_operand.vmem [shape: f32[64,1], index: 4, kind: input, shape index: {}]
  %s5 = inlined_call_operand.vmem [shape: f32[3,64], index: 5, kind: input, shape index: {}]
  %s6 = inlined_call_operand.vmem [shape: f32[3,1], index: 6, kind: input, shape index: {}]
  %s7 = inlined_call_operand.hbm [shape: f32[3,1000], index: 7, kind: output, shape index: {}]
  %s8 = sld [smem:[#allocation0]]
  $region61: #{colors_and_points_target_network.1} parent=0
    _
  %s10 = ssub.s32 1, %s8
  %s11 = scalar_select 0, %s10, %s8
  $region1: #{colors_and_points_target_network.1} parent=0
    #allocation2 [shape = 'u8[16384]{0}', space=vmem, size = 0x4000, scoped, tag = 'output window, operand 0']
    #allocation3 [shape = 's32[2]{0}', space=sflag, size = 0x8, scoped, tag = 'scoped memory for colors_and_points_target_network.1']
    %12 = vsyncpa [#allocation3], 0
    %s13 = scalar_lea.sflag [#allocation3], 1
    %14 = vsyncpa %s13, 0
    loop: start=0, step=1, limit=4
    $region2: #{colors_and_points_target_network.1} parent=1 // loop_pre_header
      _
    $region3: #{colors_and_points_target_network.1} parent=1 // loop_header
      %s16 = sphi 0, %s20
      %p17 = scmp.ge.s32.totalorder %s16, 4
      %s26 = sphi 0, %s28
      %s29 = sphi 0, %s26
      %s30 = sphi 0, %s29
      %s46 = sphi 0, %s30
      %s50 = sphi 0, %s50
      %s52 = sphi 0, %s50
      %s53 = sphi 0, %s52
      %s67 = sphi 0, %s53
      %s71 = sphi 0, %s71
      %s73 = sphi 0, %s71
      %s74 = sphi 0, %s73
      %s88 = sphi 0, %s74
      %s92 = sphi 0, %s92
      %s94 = sphi 0, %s92
      %s95 = sphi 0, %s94
      %s109 = sphi 0, %s95
      %s113 = sphi 0, %s113
      %s115 = sphi 0, %s113
      %s116 = sphi 0, %s115
      %s130 = sphi 0, %s116
      %s134 = sphi 0, %s134
      %s136 = sphi 0, %s134
      %s137 = sphi 0, %s136
      %s151 = sphi 0, %s137
      %s155 = sphi 0, %s155
      %s157 = sphi 0, %s155
      %s158 = sphi 0, %s157
      %s172 = sphi 0, %s158
      %s178 = sphi 0, %s180
      %s181 = sphi 0, %s178
      %s182 = sphi 0, %s181
      %s198 = sphi 0, %s182
    $region4: #{colors_and_points_target_network.1} parent=1 // loop_header_branch
      %19 = sbr.rel (%p17) target = $region8
    $region5: #{colors_and_points_target_network.1} parent=1 // loop_body
      %s21 = ssub.s32 %s16, 1
      %s22 = ssub.s32 %s16, 2
      %s23 = sadd.s32 %s16, 1
      %s24 = ssub.s32 %s16, %s23
      %p25 = scmp.eq.s32.totalorder %s24, 0
      %s27 = sadd.s32 %s26, 1
      %s28 = scalar_select %p25, %s26, %s27
      %p31 = pneg %p25
      %p32 = scmp.eq.s32.totalorder %s16, 1
      %p33 = por %p31, %p32
      %p34 = scmp.ne.s32.totalorder %s26, %s29
      %p35 = scmp.eq.s32.totalorder %s16, 0
      %p36 = por %p34, %p35
      %p37 = scmp.ne.s32.totalorder %s26, %s29
      %p38 = scmp.eq.s32.totalorder %s21, 1
      %p39 = por %p37, %p38
      %p40 = scmp.ne.s32.totalorder %s29, %s30
      %p41 = scmp.eq.s32.totalorder %s21, 0
      %p42 = por %p40, %p41
      %p43 = scmp.ne.s32.totalorder %s29, %s30
      %p44 = scmp.eq.s32.totalorder %s22, 1
      %p45 = por %p43, %p44
      %p47 = scmp.ne.s32.totalorder %s30, %s46
      %p48 = scmp.eq.s32.totalorder %s22, 0
      %p49 = por %p47, %p48
      %s51 = sadd.s32 %s50, 1
      %p54 = scmp.eq.s32.totalorder %s16, 1
      %p55 = scmp.ne.s32.totalorder %s50, %s52
      %p56 = scmp.eq.s32.totalorder %s16, 0
      %p57 = por %p55, %p56
      %p58 = scmp.ne.s32.totalorder %s50, %s52
      %p59 = scmp.eq.s32.totalorder %s21, 1
      %p60 = por %p58, %p59
      %p61 = scmp.ne.s32.totalorder %s52, %s53
      %p62 = scmp.eq.s32.totalorder %s21, 0
      %p63 = por %p61, %p62
      %p64 = scmp.ne.s32.totalorder %s52, %s53
      %p65 = scmp.eq.s32.totalorder %s22, 1
      %p66 = por %p64, %p65
      %p68 = scmp.ne.s32.totalorder %s53, %s67
      %p69 = scmp.eq.s32.totalorder %s22, 0
      %p70 = por %p68, %p69
      %s72 = sadd.s32 %s71, 1
      %p75 = scmp.eq.s32.totalorder %s16, 1
      %p76 = scmp.ne.s32.totalorder %s71, %s73
      %p77 = scmp.eq.s32.totalorder %s16, 0
      %p78 = por %p76, %p77
      %p79 = scmp.ne.s32.totalorder %s71, %s73
      %p80 = scmp.eq.s32.totalorder %s21, 1
      %p81 = por %p79, %p80
      %p82 = scmp.ne.s32.totalorder %s73, %s74
      %p83 = scmp.eq.s32.totalorder %s21, 0
      %p84 = por %p82, %p83
      %p85 = scmp.ne.s32.totalorder %s73, %s74
      %p86 = scmp.eq.s32.totalorder %s22, 1
      %p87 = por %p85, %p86
      %p89 = scmp.ne.s32.totalorder %s74, %s88
      %p90 = scmp.eq.s32.totalorder %s22, 0
      %p91 = por %p89, %p90
      %s93 = sadd.s32 %s92, 1
      %p96 = scmp.eq.s32.totalorder %s16, 1
      %p97 = scmp.ne.s32.totalorder %s92, %s94
      %p98 = scmp.eq.s32.totalorder %s16, 0
      %p99 = por %p97, %p98
      %p100 = scmp.ne.s32.totalorder %s92, %s94
      %p101 = scmp.eq.s32.totalorder %s21, 1
      %p102 = por %p100, %p101
      %p103 = scmp.ne.s32.totalorder %s94, %s95
      %p104 = scmp.eq.s32.totalorder %s21, 0
      %p105 = por %p103, %p104
      %p106 = scmp.ne.s32.totalorder %s94, %s95
      %p107 = scmp.eq.s32.totalorder %s22, 1
      %p108 = por %p106, %p107
      %p110 = scmp.ne.s32.totalorder %s95, %s109
      %p111 = scmp.eq.s32.totalorder %s22, 0
      %p112 = por %p110, %p111
      %s114 = sadd.s32 %s113, 1
      %p117 = scmp.eq.s32.totalorder %s16, 1
      %p118 = scmp.ne.s32.totalorder %s113, %s115
      %p119 = scmp.eq.s32.totalorder %s16, 0
      %p120 = por %p118, %p119
      %p121 = scmp.ne.s32.totalorder %s113, %s115
      %p122 = scmp.eq.s32.totalorder %s21, 1
      %p123 = por %p121, %p122
      %p124 = scmp.ne.s32.totalorder %s115, %s116
      %p125 = scmp.eq.s32.totalorder %s21, 0
      %p126 = por %p124, %p125
      %p127 = scmp.ne.s32.totalorder %s115, %s116
      %p128 = scmp.eq.s32.totalorder %s22, 1
      %p129 = por %p127, %p128
      %p131 = scmp.ne.s32.totalorder %s116, %s130
      %p132 = scmp.eq.s32.totalorder %s22, 0
      %p133 = por %p131, %p132
      %s135 = sadd.s32 %s134, 1
      %p138 = scmp.eq.s32.totalorder %s16, 1
      %p139 = scmp.ne.s32.totalorder %s134, %s136
      %p140 = scmp.eq.s32.totalorder %s16, 0
      %p141 = por %p139, %p140
      %p142 = scmp.ne.s32.totalorder %s134, %s136
      %p143 = scmp.eq.s32.totalorder %s21, 1
      %p144 = por %p142, %p143
      %p145 = scmp.ne.s32.totalorder %s136, %s137
      %p146 = scmp.eq.s32.totalorder %s21, 0
      %p147 = por %p145, %p146
      %p148 = scmp.ne.s32.totalorder %s136, %s137
      %p149 = scmp.eq.s32.totalorder %s22, 1
      %p150 = por %p148, %p149
      %p152 = scmp.ne.s32.totalorder %s137, %s151
      %p153 = scmp.eq.s32.totalorder %s22, 0
      %p154 = por %p152, %p153
      %s156 = sadd.s32 %s155, 1
      %p159 = scmp.eq.s32.totalorder %s16, 1
      %p160 = scmp.ne.s32.totalorder %s155, %s157
      %p161 = scmp.eq.s32.totalorder %s16, 0
      %p162 = por %p160, %p161
      %p163 = scmp.ne.s32.totalorder %s155, %s157
      %p164 = scmp.eq.s32.totalorder %s21, 1
      %p165 = por %p163, %p164
      %p166 = scmp.ne.s32.totalorder %s157, %s158
      %p167 = scmp.eq.s32.totalorder %s21, 0
      %p168 = por %p166, %p167
      %p169 = scmp.ne.s32.totalorder %s157, %s158
      %p170 = scmp.eq.s32.totalorder %s22, 1
      %p171 = por %p169, %p170
      %p173 = scmp.ne.s32.totalorder %s158, %s172
      %p174 = scmp.eq.s32.totalorder %s22, 0
      %p175 = por %p173, %p174
      %s176 = ssub.s32 %s16, %s23
      %p177 = scmp.eq.s32.totalorder %s176, 0
      %s179 = sadd.s32 %s178, 1
      %s180 = scalar_select %p177, %s178, %s179
      %p183 = pneg %p177
      %p184 = scmp.eq.s32.totalorder %s16, 1
      %p185 = por %p183, %p184
      %p186 = scmp.ne.s32.totalorder %s178, %s181
      %p187 = scmp.eq.s32.totalorder %s16, 0
      %p188 = por %p186, %p187
      %p189 = scmp.ne.s32.totalorder %s178, %s181
      %p190 = scmp.eq.s32.totalorder %s21, 1
      %p191 = por %p189, %p190
      %p192 = scmp.ne.s32.totalorder %s181, %s182
      %p193 = scmp.eq.s32.totalorder %s21, 0
      %p194 = por %p192, %p193
      %p195 = scmp.ne.s32.totalorder %s181, %s182
      %p196 = scmp.eq.s32.totalorder %s22, 1
      %p197 = por %p195, %p196
      %p199 = scmp.ne.s32.totalorder %s182, %s198
      %p200 = scmp.eq.s32.totalorder %s22, 0
      %p201 = por %p199, %p200
      %p202 = scmp.le.s32.totalorder 1, %s16
      %p203 = scmp.lt.s32.totalorder %s16, 3
      %p204 = pnand %p202, %p203
      %p205 = pneg %p204
      // Predicated region
      $region9: #{colors_and_points_target_network.1} parent=5 // pred_check
        _
      $region10: #{colors_and_points_target_network.1} parent=5 // pred_check_branch
        %207 = sbr.rel (%p204) target = $region12
      $region11: #{colors_and_points_target_network.1} parent=5 // pred_region
        %s208 = ssub.s32 %s16, 1
        // Predicated region
        $region13: #{colors_and_points_target_network.1} parent=11 // pred_check
          %p209 = pneg %p63
        $region14: #{colors_and_points_target_network.1} parent=11 // pred_check_branch
          %211 = sbr.rel (%p209) target = $region16
        $region15: #{colors_and_points_target_network.1} parent=11 // pred_region
          _
        $region16: #{colors_and_points_target_network.1} parent=11 // pred_fallthru
          _
        // Predicated region
        $region17: #{colors_and_points_target_network.1} parent=11 // pred_check
          %p212 = pneg %p84
        $region18: #{colors_and_points_target_network.1} parent=11 // pred_check_branch
          %214 = sbr.rel (%p212) target = $region20
        $region19: #{colors_and_points_target_network.1} parent=11 // pred_region
          _
        $region20: #{colors_and_points_target_network.1} parent=11 // pred_fallthru
          _
        // Predicated region
        $region21: #{colors_and_points_target_network.1} parent=11 // pred_check
          %p215 = pneg %p105
        $region22: #{colors_and_points_target_network.1} parent=11 // pred_check_branch
          %217 = sbr.rel (%p215) target = $region24
        $region23: #{colors_and_points_target_network.1} parent=11 // pred_region
          _
        $region24: #{colors_and_points_target_network.1} parent=11 // pred_fallthru
          _
        // Predicated region
        $region25: #{colors_and_points_target_network.1} parent=11 // pred_check
          %p218 = pneg %p126
        $region26: #{colors_and_points_target_network.1} parent=11 // pred_check_branch
          %220 = sbr.rel (%p218) target = $region28
        $region27: #{colors_and_points_target_network.1} parent=11 // pred_region
          _
        $region28: #{colors_and_points_target_network.1} parent=11 // pred_fallthru
          _
        // Predicated region
        $region29: #{colors_and_points_target_network.1} parent=11 // pred_check
          %p221 = pneg %p147
        $region30: #{colors_and_points_target_network.1} parent=11 // pred_check_branch
          %223 = sbr.rel (%p221) target = $region32
        $region31: #{colors_and_points_target_network.1} parent=11 // pred_region
          _
        $region32: #{colors_and_points_target_network.1} parent=11 // pred_fallthru
          _
        // Predicated region
        $region33: #{colors_and_points_target_network.1} parent=11 // pred_check
          %p224 = pneg %p168
        $region34: #{colors_and_points_target_network.1} parent=11 // pred_check_branch
          %226 = sbr.rel (%p224) target = $region36
        $region35: #{colors_and_points_target_network.1} parent=11 // pred_region
          _
        $region36: #{colors_and_points_target_network.1} parent=11 // pred_fallthru
          _
      $region12: #{colors_and_points_target_network.1} parent=5 // pred_fallthru
        _
      %p227 = scmp.lt.s32.totalorder %s16, 2
      // Predicated region
      $region37: #{colors_and_points_target_network.1} parent=5 // pred_check
        %p228 = pneg %p227
      $region38: #{colors_and_points_target_network.1} parent=5 // pred_check_branch
        %230 = sbr.rel (%p228) target = $region40
      $region39: #{colors_and_points_target_network.1} parent=5 // pred_region
        // Predicated region
        $region41: #{colors_and_points_target_network.1} parent=39 // pred_check
          %p231 = pneg %p36
        $region42: #{colors_and_points_target_network.1} parent=39 // pred_check_branch
          %233 = sbr.rel (%p231) target = $region44
        $region43: #{colors_and_points_target_network.1} parent=39 // pred_region
          %s234 = smul.u32 4, %s16
          %p235 = scmp.lt.s32.totalorder %s234, 7
          %s236 = scalar_select %p235, %s234, 7
          %s237 = smul.addr %s236, 4
          %s238 = scalar_lea.vmem %s0, %s237
          %s239 = smul.u32 4, %s16
        $region44: #{colors_and_points_target_network.1} parent=39 // pred_fallthru
          _
      $region40: #{colors_and_points_target_network.1} parent=5 // pred_fallthru
        _
      %p240 = scmp.le.s32.totalorder 1, %s16
      %p241 = scmp.lt.s32.totalorder %s16, 3
      %p242 = pnand %p240, %p241
      %p243 = pneg %p242
      // Predicated region
      $region45: #{colors_and_points_target_network.1} parent=5 // pred_check
        _
      $region46: #{colors_and_points_target_network.1} parent=5 // pred_check_branch
        %245 = sbr.rel (%p242) target = $region48
      $region47: #{colors_and_points_target_network.1} parent=5 // pred_region
        %s246 = ssub.s32 %s16, 1
        %s247 = smul.u32 4, %s21
        %p248 = scmp.lt.s32.totalorder %s247, 7
        %s249 = scalar_select %p248, %s247, 7
        %s250 = smul.addr %s249, 4
        %s251 = scalar_lea.vmem %s0, %s250
        %p252 = pneg %p42
        %p253 = pneg %p39
        %p254 = pneg %p63
        %p255 = pneg %p60
        %p256 = pneg %p84
        %p257 = pneg %p81
        %p258 = pneg %p105
        %p259 = pneg %p102
        %p260 = pneg %p126
        %p261 = pneg %p123
        %p262 = pneg %p147
        %p263 = pneg %p144
        %p264 = pneg %p168
        %p265 = pneg %p165
        %p266 = pneg %p194
        %p267 = pneg %p191
        %s268 = sand.u32 %s181, 1
        %s269 = scalar_lea.sflag [#allocation3], %s268
        %s270 = sand.u32 %s181, 1
        %s271 = smul.addr %s270, 16
        %s272 = scalar_lea.vmem [#allocation2], %s271
        %s273 = smul.u32 4, %s21
        %p274 = scmp.lt.s32.totalorder %s273, 7
        %s275 = scalar_select %p274, %s273, 7
        %s276 = smul.addr %s275, 4
        %s277 = scalar_lea.vmem %s0, %s276
        %s278 = smul.u32 4, %s21
        %s279 = smul.u32 4, %s21
        %v280 = vld [vmem:[%s277] sm:$0x77]
        %v281 = vld [vmem:[%s277 + $0x8] sm:$0x77]
        %v282 = vld [vmem:[%s1] sm:$0xff]
        %v283 = vld [vmem:[%s1 + $0x8] sm:$0xff]
        %v284 = vld [vmem:[%s1 + $0x10] sm:$0xff]
        %v285 = vld [vmem:[%s1 + $0x18] sm:$0xff]
        %287 = vset.pattern.permute.xlu0 0
        %288 = vperm.xlu0 %287, %v282
        %v289 = vpop.permute.xlu0 %288
        %292 = vset.pattern.permute.xlu0 0
        %293 = vperm.xlu0 %292, %v283
        %v294 = vpop.permute.xlu0 %293
        %297 = vset.pattern.permute.xlu0 0
        %298 = vperm.xlu0 %297, %v284
        %v299 = vpop.permute.xlu0 %298
        %302 = vset.pattern.permute.xlu0 0
        %303 = vperm.xlu0 %302, %v285
        %v304 = vpop.permute.xlu0 %303
        %v308 = vperm.slane %v280, 0
        %v309 = vperm.slane %v280, 4
        %v310 = vperm.slane %v281, 0
        %v311 = vperm.slane %v281, 4
        %v316 = vperm.slane %v308, 0
        %v317 = vperm.slane %v309, 0
        %v318 = vperm.slane %v310, 0
        %v319 = vperm.slane %v311, 0
        %v320 = vmul.f32 %v289, %v316
        %v321 = vmul.f32 %v289, %v317
        %v322 = vmul.f32 %v289, %v318
        %v323 = vmul.f32 %v289, %v319
        %v324 = vmul.f32 %v294, %v316
        %v325 = vmul.f32 %v294, %v317
        %v326 = vmul.f32 %v294, %v318
        %v327 = vmul.f32 %v294, %v319
        %v328 = vmul.f32 %v299, %v316
        %v329 = vmul.f32 %v299, %v317
        %v330 = vmul.f32 %v299, %v318
        %v331 = vmul.f32 %v299, %v319
        %v332 = vmul.f32 %v304, %v316
        %v333 = vmul.f32 %v304, %v317
        %v334 = vmul.f32 %v304, %v318
        %v335 = vmul.f32 %v304, %v319
        %336 = vset.pattern.permute.xlu0 1
        %337 = vperm.xlu0 %336, %v282
        %v338 = vpop.permute.xlu0 %337
        %340 = vset.pattern.permute.xlu0 1
        %341 = vperm.xlu0 %340, %v283
        %v342 = vpop.permute.xlu0 %341
        %344 = vset.pattern.permute.xlu0 1
        %345 = vperm.xlu0 %344, %v284
        %v346 = vpop.permute.xlu0 %345
        %348 = vset.pattern.permute.xlu0 1
        %349 = vperm.xlu0 %348, %v285
        %v350 = vpop.permute.xlu0 %349
        %v352 = vperm.slane %v280, 1
        %v353 = vperm.slane %v280, 5
        %v354 = vperm.slane %v281, 1
        %v355 = vperm.slane %v281, 5
        %v360 = vperm.slane %v352, 1
        %v361 = vperm.slane %v353, 1
        %v362 = vperm.slane %v354, 1
        %v363 = vperm.slane %v355, 1
        %v364 = vmul.f32 %v338, %v360
        %v365 = vmul.f32 %v338, %v361
        %v366 = vmul.f32 %v338, %v362
        %v367 = vmul.f32 %v338, %v363
        %v368 = vmul.f32 %v342, %v360
        %v369 = vmul.f32 %v342, %v361
        %v370 = vmul.f32 %v342, %v362
        %v371 = vmul.f32 %v342, %v363
        %v372 = vmul.f32 %v346, %v360
        %v373 = vmul.f32 %v346, %v361
        %v374 = vmul.f32 %v346, %v362
        %v375 = vmul.f32 %v346, %v363
        %v376 = vmul.f32 %v350, %v360
        %v377 = vmul.f32 %v350, %v361
        %v378 = vmul.f32 %v350, %v362
        %v379 = vmul.f32 %v350, %v363
        %v380 = vadd.f32 %v320, %v364
        %v381 = vadd.f32 %v321, %v365
        %v382 = vadd.f32 %v322, %v366
        %v383 = vadd.f32 %v323, %v367
        %v384 = vadd.f32 %v324, %v368
        %v385 = vadd.f32 %v325, %v369
        %v386 = vadd.f32 %v326, %v370
        %v387 = vadd.f32 %v327, %v371
        %v388 = vadd.f32 %v328, %v372
        %v389 = vadd.f32 %v329, %v373
        %v390 = vadd.f32 %v330, %v374
        %v391 = vadd.f32 %v331, %v375
        %v392 = vadd.f32 %v332, %v376
        %v393 = vadd.f32 %v333, %v377
        %v394 = vadd.f32 %v334, %v378
        %v395 = vadd.f32 %v335, %v379
        %396 = vset.pattern.permute.xlu0 2
        %397 = vperm.xlu0 %396, %v282
        %v398 = vpop.permute.xlu0 %397
        %400 = vset.pattern.permute.xlu0 2
        %401 = vperm.xlu0 %400, %v283
        %v402 = vpop.permute.xlu0 %401
        %404 = vset.pattern.permute.xlu0 2
        %405 = vperm.xlu0 %404, %v284
        %v406 = vpop.permute.xlu0 %405
        %408 = vset.pattern.permute.xlu0 2
        %409 = vperm.xlu0 %408, %v285
        %v410 = vpop.permute.xlu0 %409
        %v412 = vperm.slane %v280, 2
        %v413 = vperm.slane %v280, 6
        %v414 = vperm.slane %v281, 2
        %v415 = vperm.slane %v281, 6
        %v420 = vperm.slane %v412, 2
        %v421 = vperm.slane %v413, 2
        %v422 = vperm.slane %v414, 2
        %v423 = vperm.slane %v415, 2
        %v424 = vmul.f32 %v398, %v420
        %v425 = vmul.f32 %v398, %v421
        %v426 = vmul.f32 %v398, %v422
        %v427 = vmul.f32 %v398, %v423
        %v428 = vmul.f32 %v402, %v420
        %v429 = vmul.f32 %v402, %v421
        %v430 = vmul.f32 %v402, %v422
        %v431 = vmul.f32 %v402, %v423
        %v432 = vmul.f32 %v406, %v420
        %v433 = vmul.f32 %v406, %v421
        %v434 = vmul.f32 %v406, %v422
        %v435 = vmul.f32 %v406, %v423
        %v436 = vmul.f32 %v410, %v420
        %v437 = vmul.f32 %v410, %v421
        %v438 = vmul.f32 %v410, %v422
        %v439 = vmul.f32 %v410, %v423
        %v440 = vadd.f32 %v380, %v424
        %v441 = vadd.f32 %v381, %v425
        %v442 = vadd.f32 %v382, %v426
        %v443 = vadd.f32 %v383, %v427
        %v444 = vadd.f32 %v384, %v428
        %v445 = vadd.f32 %v385, %v429
        %v446 = vadd.f32 %v386, %v430
        %v447 = vadd.f32 %v387, %v431
        %v448 = vadd.f32 %v388, %v432
        %v449 = vadd.f32 %v389, %v433
        %v450 = vadd.f32 %v390, %v434
        %v451 = vadd.f32 %v391, %v435
        %v452 = vadd.f32 %v392, %v436
        %v453 = vadd.f32 %v393, %v437
        %v454 = vadd.f32 %v394, %v438
        %v455 = vadd.f32 %v395, %v439
        %v456 = vld [vmem:[%s2] sm:$0xff]
        %v457 = vld [vmem:[%s2 + $0x8] sm:$0xff]
        %v458 = vld [vmem:[%s2 + $0x10] sm:$0xff]
        %v459 = vld [vmem:[%s2 + $0x18] sm:$0xff]
        %461 = vset.pattern.permute.xlu0 0
        %462 = vperm.xlu0 %461, %v456
        %v463 = vpop.permute.xlu0 %462
        %466 = vset.pattern.permute.xlu0 0
        %467 = vperm.xlu0 %466, %v457
        %v468 = vpop.permute.xlu0 %467
        %471 = vset.pattern.permute.xlu0 0
        %472 = vperm.xlu0 %471, %v458
        %v473 = vpop.permute.xlu0 %472
        %476 = vset.pattern.permute.xlu0 0
        %477 = vperm.xlu0 %476, %v459
        %v478 = vpop.permute.xlu0 %477
        %v480 = vadd.f32 %v440, %v463
        %v481 = vadd.f32 %v441, %v463
        %v482 = vadd.f32 %v442, %v463
        %v483 = vadd.f32 %v443, %v463
        %v484 = vadd.f32 %v444, %v468
        %v485 = vadd.f32 %v445, %v468
        %v486 = vadd.f32 %v446, %v468
        %v487 = vadd.f32 %v447, %v468
        %v488 = vadd.f32 %v448, %v473
        %v489 = vadd.f32 %v449, %v473
        %v490 = vadd.f32 %v450, %v473
        %v491 = vadd.f32 %v451, %v473
        %v492 = vadd.f32 %v452, %v478
        %v493 = vadd.f32 %v453, %v478
        %v494 = vadd.f32 %v454, %v478
        %v495 = vadd.f32 %v455, %v478
        %v496 = vtanh.pop %v480
        %v497 = vtanh.pop %v481
        %v498 = vtanh.pop %v482
        %v499 = vtanh.pop %v483
        %v500 = vtanh.pop %v484
        %v501 = vtanh.pop %v485
        %v502 = vtanh.pop %v486
        %v503 = vtanh.pop %v487
        %v504 = vtanh.pop %v488
        %v505 = vtanh.pop %v489
        %v506 = vtanh.pop %v490
        %v507 = vtanh.pop %v491
        %v508 = vtanh.pop %v492
        %v509 = vtanh.pop %v493
        %v510 = vtanh.pop %v494
        %v511 = vtanh.pop %v495
        %v512 = vld [vmem:[%s3] sm:$0xff]
        %v513 = vld [vmem:[%s3 + $0x8] sm:$0xff]
        %v514 = vld [vmem:[%s3 + $0x10] sm:$0xff]
        %v515 = vld [vmem:[%s3 + $0x18] sm:$0xff]
        %v516 = vld [vmem:[%s3 + $0x20] sm:$0xff]
        %v517 = vld [vmem:[%s3 + $0x28] sm:$0xff]
        %v518 = vld [vmem:[%s3 + $0x30] sm:$0xff]
        %v519 = vld [vmem:[%s3 + $0x38] sm:$0xff]
        %v520 = vld [vmem:[%s4] sm:$0xff]
        %v521 = vld [vmem:[%s4 + $0x8] sm:$0xff]
        %v522 = vld [vmem:[%s4 + $0x10] sm:$0xff]
        %v523 = vld [vmem:[%s4 + $0x18] sm:$0xff]
        %v524 = vld [vmem:[%s4 + $0x20] sm:$0xff]
        %v525 = vld [vmem:[%s4 + $0x28] sm:$0xff]
        %v526 = vld [vmem:[%s4 + $0x30] sm:$0xff]
        %v527 = vld [vmem:[%s4 + $0x38] sm:$0xff]
        %529 = vset.pattern.permute.xlu0 0
        %530 = vperm.xlu0 %529, %v520
        %v531 = vpop.permute.xlu0 %530
        %534 = vset.pattern.permute.xlu0 0
        %535 = vperm.xlu0 %534, %v521
        %v536 = vpop.permute.xlu0 %535
        %539 = vset.pattern.permute.xlu0 0
        %540 = vperm.xlu0 %539, %v522
        %v541 = vpop.permute.xlu0 %540
        %544 = vset.pattern.permute.xlu0 0
        %545 = vperm.xlu0 %544, %v523
        %v546 = vpop.permute.xlu0 %545
        %549 = vset.pattern.permute.xlu0 0
        %550 = vperm.xlu0 %549, %v524
        %v551 = vpop.permute.xlu0 %550
        %554 = vset.pattern.permute.xlu0 0
        %555 = vperm.xlu0 %554, %v525
        %v556 = vpop.permute.xlu0 %555
        %559 = vset.pattern.permute.xlu0 0
        %560 = vperm.xlu0 %559, %v526
        %v561 = vpop.permute.xlu0 %560
        %564 = vset.pattern.permute.xlu0 0
        %565 = vperm.xlu0 %564, %v527
        %v566 = vpop.permute.xlu0 %565
        %vm568 = vcmask 261120
        %v570 = vsel %vm568, %v512, 0
        %v573 = vsel %vm568, %v513, 0
        %v576 = vsel %vm568, %v514, 0
        %v579 = vsel %vm568, %v515, 0
        %v582 = vsel %vm568, %v516, 0
        %v585 = vsel %vm568, %v517, 0
        %v588 = vsel %vm568, %v518, 0
        %v591 = vsel %vm568, %v519, 0
        %593 = vmatpush.msra.mxu0 0.0
        %594 = vmatpush.msra.mxu0 0.0
        %595 = vmatpush.msra.mxu0 0.0
        %596 = vmatpush.msra.mxu0 0.0
        %597 = vmatpush.msra.mxu0 0.0
        %598 = vmatpush.msra.mxu0 0.0
        %599 = vmatpush.msra.mxu0 0.0
        %600 = vmatpush.msra.mxu0 0.0
        %601 = vmatpush.msra.mxu0 0.0
        %602 = vmatpush.msra.mxu0 0.0
        %603 = vmatpush.msra.mxu0 0.0
        %604 = vmatpush.msra.mxu0 0.0
        %605 = vmatpush.msra.mxu0 %v508
        %606 = vmatpush.msra.mxu0 %v504
        %607 = vmatpush.msra.mxu0 %v500
        %608 = vmatpush.msra.mxu0 %v496
        %609 = vmatmul.f32.gmra.mxu0 %v570
        %v610 = vpop.f32.mrf.mxu0
        %v611 = vadd.f32 %v531, %v610
        %612 = vmatmul.f32.gmra.mxu0 %v573
        %v613 = vpop.f32.mrf.mxu0
        %v614 = vadd.f32 %v536, %v613
        %615 = vmatmul.f32.gmra.mxu0 %v576
        %v616 = vpop.f32.mrf.mxu0
        %v617 = vadd.f32 %v541, %v616
        %618 = vmatmul.f32.gmra.mxu0 %v579
        %v619 = vpop.f32.mrf.mxu0
        %v620 = vadd.f32 %v546, %v619
        %621 = vmatmul.f32.gmra.mxu0 %v582
        %v622 = vpop.f32.mrf.mxu0
        %v623 = vadd.f32 %v551, %v622
        %624 = vmatmul.f32.gmra.mxu0 %v585
        %v625 = vpop.f32.mrf.mxu0
        %v626 = vadd.f32 %v556, %v625
        %627 = vmatmul.f32.gmra.mxu0 %v588
        %v628 = vpop.f32.mrf.mxu0
        %v629 = vadd.f32 %v561, %v628
        %630 = vmatmul.f32.gmra.mxu0 %v591
        %v631 = vpop.f32.mrf.mxu0
        %v632 = vadd.f32 %v566, %v631
        %633 = vdwg.mxu0
        %634 = vmatpush.msra.mxu0 0.0
        %635 = vmatpush.msra.mxu0 0.0
        %636 = vmatpush.msra.mxu0 0.0
        %637 = vmatpush.msra.mxu0 0.0
        %638 = vmatpush.msra.mxu0 0.0
        %639 = vmatpush.msra.mxu0 0.0
        %640 = vmatpush.msra.mxu0 0.0
        %641 = vmatpush.msra.mxu0 0.0
        %642 = vmatpush.msra.mxu0 0.0
        %643 = vmatpush.msra.mxu0 0.0
        %644 = vmatpush.msra.mxu0 0.0
        %645 = vmatpush.msra.mxu0 0.0
        %646 = vmatpush.msra.mxu0 %v509
        %647 = vmatpush.msra.mxu0 %v505
        %648 = vmatpush.msra.mxu0 %v501
        %649 = vmatpush.msra.mxu0 %v497
        %650 = vmatmul.f32.gmra.mxu0 %v570
        %v651 = vpop.f32.mrf.mxu0
        %v652 = vadd.f32 %v531, %v651
        %653 = vmatmul.f32.gmra.mxu0 %v573
        %v654 = vpop.f32.mrf.mxu0
        %v655 = vadd.f32 %v536, %v654
        %656 = vmatmul.f32.gmra.mxu0 %v576
        %v657 = vpop.f32.mrf.mxu0
        %v658 = vadd.f32 %v541, %v657
        %659 = vmatmul.f32.gmra.mxu0 %v579
        %v660 = vpop.f32.mrf.mxu0
        %v661 = vadd.f32 %v546, %v660
        %662 = vmatmul.f32.gmra.mxu0 %v582
        %v663 = vpop.f32.mrf.mxu0
        %v664 = vadd.f32 %v551, %v663
        %665 = vmatmul.f32.gmra.mxu0 %v585
        %v666 = vpop.f32.mrf.mxu0
        %v667 = vadd.f32 %v556, %v666
        %668 = vmatmul.f32.gmra.mxu0 %v588
        %v669 = vpop.f32.mrf.mxu0
        %v670 = vadd.f32 %v561, %v669
        %671 = vmatmul.f32.gmra.mxu0 %v591
        %v672 = vpop.f32.mrf.mxu0
        %v673 = vadd.f32 %v566, %v672
        %674 = vdwg.mxu0
        %675 = vmatpush.msra.mxu0 0.0
        %676 = vmatpush.msra.mxu0 0.0
        %677 = vmatpush.msra.mxu0 0.0
        %678 = vmatpush.msra.mxu0 0.0
        %679 = vmatpush.msra.mxu0 0.0
        %680 = vmatpush.msra.mxu0 0.0
        %681 = vmatpush.msra.mxu0 0.0
        %682 = vmatpush.msra.mxu0 0.0
        %683 = vmatpush.msra.mxu0 0.0
        %684 = vmatpush.msra.mxu0 0.0
        %685 = vmatpush.msra.mxu0 0.0
        %686 = vmatpush.msra.mxu0 0.0
        %687 = vmatpush.msra.mxu0 %v510
        %688 = vmatpush.msra.mxu0 %v506
        %689 = vmatpush.msra.mxu0 %v502
        %690 = vmatpush.msra.mxu0 %v498
        %691 = vmatmul.f32.gmra.mxu0 %v570
        %v692 = vpop.f32.mrf.mxu0
        %v693 = vadd.f32 %v531, %v692
        %694 = vmatmul.f32.gmra.mxu0 %v573
        %v695 = vpop.f32.mrf.mxu0
        %v696 = vadd.f32 %v536, %v695
        %697 = vmatmul.f32.gmra.mxu0 %v576
        %v698 = vpop.f32.mrf.mxu0
        %v699 = vadd.f32 %v541, %v698
        %700 = vmatmul.f32.gmra.mxu0 %v579
        %v701 = vpop.f32.mrf.mxu0
        %v702 = vadd.f32 %v546, %v701
        %703 = vmatmul.f32.gmra.mxu0 %v582
        %v704 = vpop.f32.mrf.mxu0
        %v705 = vadd.f32 %v551, %v704
        %706 = vmatmul.f32.gmra.mxu0 %v585
        %v707 = vpop.f32.mrf.mxu0
        %v708 = vadd.f32 %v556, %v707
        %709 = vmatmul.f32.gmra.mxu0 %v588
        %v710 = vpop.f32.mrf.mxu0
        %v711 = vadd.f32 %v561, %v710
        %712 = vmatmul.f32.gmra.mxu0 %v591
        %v713 = vpop.f32.mrf.mxu0
        %v714 = vadd.f32 %v566, %v713
        %715 = vdwg.mxu0
        %716 = vmatpush.msra.mxu0 0.0
        %717 = vmatpush.msra.mxu0 0.0
        %718 = vmatpush.msra.mxu0 0.0
        %719 = vmatpush.msra.mxu0 0.0
        %720 = vmatpush.msra.mxu0 0.0
        %721 = vmatpush.msra.mxu0 0.0
        %722 = vmatpush.msra.mxu0 0.0
        %723 = vmatpush.msra.mxu0 0.0
        %724 = vmatpush.msra.mxu0 0.0
        %725 = vmatpush.msra.mxu0 0.0
        %726 = vmatpush.msra.mxu0 0.0
        %727 = vmatpush.msra.mxu0 0.0
        %728 = vmatpush.msra.mxu0 %v511
        %729 = vmatpush.msra.mxu0 %v507
        %730 = vmatpush.msra.mxu0 %v503
        %731 = vmatpush.msra.mxu0 %v499
        %732 = vmatmul.f32.gmra.mxu0 %v570
        %v733 = vpop.f32.mrf.mxu0
        %v734 = vadd.f32 %v531, %v733
        %735 = vmatmul.f32.gmra.mxu0 %v573
        %v736 = vpop.f32.mrf.mxu0
        %v737 = vadd.f32 %v536, %v736
        %738 = vmatmul.f32.gmra.mxu0 %v576
        %v739 = vpop.f32.mrf.mxu0
        %v740 = vadd.f32 %v541, %v739
        %741 = vmatmul.f32.gmra.mxu0 %v579
        %v742 = vpop.f32.mrf.mxu0
        %v743 = vadd.f32 %v546, %v742
        %744 = vmatmul.f32.gmra.mxu0 %v582
        %v745 = vpop.f32.mrf.mxu0
        %v746 = vadd.f32 %v551, %v745
        %747 = vmatmul.f32.gmra.mxu0 %v585
        %v748 = vpop.f32.mrf.mxu0
        %v749 = vadd.f32 %v556, %v748
        %750 = vmatmul.f32.gmra.mxu0 %v588
        %v751 = vpop.f32.mrf.mxu0
        %v752 = vadd.f32 %v561, %v751
        %753 = vmatmul.f32.gmra.mxu0 %v591
        %v754 = vpop.f32.mrf.mxu0
        %v755 = vadd.f32 %v566, %v754
        %756 = vdwg.mxu0
        %v757 = vtanh.pop %v611
        %v758 = vtanh.pop %v652
        %v759 = vtanh.pop %v693
        %v760 = vtanh.pop %v734
        %v761 = vtanh.pop %v614
        %v762 = vtanh.pop %v655
        %v763 = vtanh.pop %v696
        %v764 = vtanh.pop %v737
        %v765 = vtanh.pop %v617
        %v766 = vtanh.pop %v658
        %v767 = vtanh.pop %v699
        %v768 = vtanh.pop %v740
        %v769 = vtanh.pop %v620
        %v770 = vtanh.pop %v661
        %v771 = vtanh.pop %v702
        %v772 = vtanh.pop %v743
        %v773 = vtanh.pop %v623
        %v774 = vtanh.pop %v664
        %v775 = vtanh.pop %v705
        %v776 = vtanh.pop %v746
        %v777 = vtanh.pop %v626
        %v778 = vtanh.pop %v667
        %v779 = vtanh.pop %v708
        %v780 = vtanh.pop %v749
        %v781 = vtanh.pop %v629
        %v782 = vtanh.pop %v670
        %v783 = vtanh.pop %v711
        %v784 = vtanh.pop %v752
        %v785 = vtanh.pop %v632
        %v786 = vtanh.pop %v673
        %v787 = vtanh.pop %v714
        %v788 = vtanh.pop %v755
        %v789 = vld [vmem:[%s5] sm:$0x7]
        %v790 = vld [vmem:[%s6] sm:$0x7]
        %792 = vset.pattern.permute.xlu0 0
        %793 = vperm.xlu0 %792, %v790
        %v794 = vpop.permute.xlu0 %793
        %vm796 = vcmask 523264
        %v798 = vsel %vm796, %v789, 0
        %800 = vmatpush.msra.mxu0 0.0
        %801 = vmatpush.msra.mxu0 0.0
        %802 = vmatpush.msra.mxu0 0.0
        %803 = vmatpush.msra.mxu0 0.0
        %804 = vmatpush.msra.mxu0 0.0
        %805 = vmatpush.msra.mxu0 0.0
        %806 = vmatpush.msra.mxu0 0.0
        %807 = vmatpush.msra.mxu0 0.0
        %808 = vmatpush.msra.mxu0 %v785
        %809 = vmatpush.msra.mxu0 %v781
        %810 = vmatpush.msra.mxu0 %v777
        %811 = vmatpush.msra.mxu0 %v773
        %812 = vmatpush.msra.mxu0 %v769
        %813 = vmatpush.msra.mxu0 %v765
        %814 = vmatpush.msra.mxu0 %v761
        %815 = vmatpush.msra.mxu0 %v757
        %816 = vmatmul.f32.gmra.mxu0 %v798
        %v817 = vpop.f32.mrf.mxu0
        %v818 = vadd.f32 %v794, %v817
        %819 = vdwg.mxu0
        %820 = vmatpush.msra.mxu0 0.0
        %821 = vmatpush.msra.mxu0 0.0
        %822 = vmatpush.msra.mxu0 0.0
        %823 = vmatpush.msra.mxu0 0.0
        %824 = vmatpush.msra.mxu0 0.0
        %825 = vmatpush.msra.mxu0 0.0
        %826 = vmatpush.msra.mxu0 0.0
        %827 = vmatpush.msra.mxu0 0.0
        %828 = vmatpush.msra.mxu0 %v786
        %829 = vmatpush.msra.mxu0 %v782
        %830 = vmatpush.msra.mxu0 %v778
        %831 = vmatpush.msra.mxu0 %v774
        %832 = vmatpush.msra.mxu0 %v770
        %833 = vmatpush.msra.mxu0 %v766
        %834 = vmatpush.msra.mxu0 %v762
        %835 = vmatpush.msra.mxu0 %v758
        %836 = vmatmul.f32.gmra.mxu0 %v798
        %v837 = vpop.f32.mrf.mxu0
        %v838 = vadd.f32 %v794, %v837
        %839 = vdwg.mxu0
        %840 = vmatpush.msra.mxu0 0.0
        %841 = vmatpush.msra.mxu0 0.0
        %842 = vmatpush.msra.mxu0 0.0
        %843 = vmatpush.msra.mxu0 0.0
        %844 = vmatpush.msra.mxu0 0.0
        %845 = vmatpush.msra.mxu0 0.0
        %846 = vmatpush.msra.mxu0 0.0
        %847 = vmatpush.msra.mxu0 0.0
        %848 = vmatpush.msra.mxu0 %v787
        %849 = vmatpush.msra.mxu0 %v783
        %850 = vmatpush.msra.mxu0 %v779
        %851 = vmatpush.msra.mxu0 %v775
        %852 = vmatpush.msra.mxu0 %v771
        %853 = vmatpush.msra.mxu0 %v767
        %854 = vmatpush.msra.mxu0 %v763
        %855 = vmatpush.msra.mxu0 %v759
        %856 = vmatmul.f32.gmra.mxu0 %v798
        %v857 = vpop.f32.mrf.mxu0
        %v858 = vadd.f32 %v794, %v857
        %859 = vdwg.mxu0
        %860 = vmatpush.msra.mxu0 0.0
        %861 = vmatpush.msra.mxu0 0.0
        %862 = vmatpush.msra.mxu0 0.0
        %863 = vmatpush.msra.mxu0 0.0
        %864 = vmatpush.msra.mxu0 0.0
        %865 = vmatpush.msra.mxu0 0.0
        %866 = vmatpush.msra.mxu0 0.0
        %867 = vmatpush.msra.mxu0 0.0
        %868 = vmatpush.msra.mxu0 %v788
        %869 = vmatpush.msra.mxu0 %v784
        %870 = vmatpush.msra.mxu0 %v780
        %871 = vmatpush.msra.mxu0 %v776
        %872 = vmatpush.msra.mxu0 %v772
        %873 = vmatpush.msra.mxu0 %v768
        %874 = vmatpush.msra.mxu0 %v764
        %875 = vmatpush.msra.mxu0 %v760
        %876 = vmatmul.f32.gmra.mxu0 %v798
        %v877 = vpop.f32.mrf.mxu0
        %v878 = vadd.f32 %v794, %v877
        %879 = vdwg.mxu0
        %v884 = vrot.slane %v838, 4
        %v885 = vrot.slane %v878, 4
        %vm886 = vcmask 1043456
        %v887 = vsel %vm886, %v818, %v884
        %v888 = vsel %vm886, %v858, %v885
        %891 = vst [vmem:[%s272] sm:$0x77] %v887
        %892 = vst [vmem:[%s272 + $0x8] sm:$0x77] %v888
        %s893 = sand.u32 %s181, 1
        %s894 = scalar_lea.sflag [#allocation3], %s893
        %s895 = sand.u32 %s181, 1
        %s896 = smul.addr %s895, 16
        %s897 = scalar_lea.vmem [#allocation2], %s896
        // Predicated region
        $region49: #{colors_and_points_target_network.1} parent=47 // pred_check
          %p898 = pneg %p191
        $region50: #{colors_and_points_target_network.1} parent=47 // pred_check_branch
          %900 = sbr.rel (%p898) target = $region52
        $region51: #{colors_and_points_target_network.1} parent=47 // pred_region
          %s901 = smul.u32 4, %s21
          %903 = vsyncadd %s894, 0
          %s904 = smul.addr %s901, 4
          %s905 = scalar_lea.hbm %s7, %s904
          %s907 = sshll.u32 %s897, 4
          %s908 = int_to_ptr.vmem [resolvable:$true] %s907
          %s909 = sshll.u32 %s905, 4
          %s910 = int_to_ptr.hbm [resolvable:$true] %s909
          %912 = dma.vmem_to_hbm [thread:$0]  %s908, 256, %s910, %s894
        $region52: #{colors_and_points_target_network.1} parent=47 // pred_fallthru
          _
      $region48: #{colors_and_points_target_network.1} parent=5 // pred_fallthru
        _
      %p913 = scmp.le.s32.totalorder 2, %s16
      // Predicated region
      $region53: #{colors_and_points_target_network.1} parent=5 // pred_check
        %p914 = pneg %p913
      $region54: #{colors_and_points_target_network.1} parent=5 // pred_check_branch
        %916 = sbr.rel (%p914) target = $region56
      $region55: #{colors_and_points_target_network.1} parent=5 // pred_region
        %s917 = ssub.s32 %s16, 2
        // Predicated region
        $region57: #{colors_and_points_target_network.1} parent=55 // pred_check
          %p918 = pneg %p197
        $region58: #{colors_and_points_target_network.1} parent=55 // pred_check_branch
          %920 = sbr.rel (%p918) target = $region60
        $region59: #{colors_and_points_target_network.1} parent=55 // pred_region
          %s921 = sand.u32 %s182, 1
          %s922 = scalar_lea.sflag [#allocation3], %s921
          %s923 = sand.u32 %s182, 1
          %s924 = smul.addr %s923, 16
          %s925 = scalar_lea.vmem [#allocation2], %s924
          %927 = dma.done %s922, 256
        $region60: #{colors_and_points_target_network.1} parent=55 // pred_fallthru
          _
      $region56: #{colors_and_points_target_network.1} parent=5 // pred_fallthru
        _
    $region6: #{colors_and_points_target_network.1} parent=1 // loop_footer
      %s20 = sadd.s32 1, %s16
    $region7: #{colors_and_points_target_network.1} parent=1 // loop_footer_branch
      %15 = sbr.rel target = $region3
    $region8: #{colors_and_points_target_network.1} parent=1 // loop_exit
      _
    %928 = vsyncpa [#allocation3], 1
    %s929 = scalar_lea.sflag [#allocation3], 1
    %930 = vsyncpa %s929, 1

</llo_original>
